<compile_context>
chip_gen: v7x
topology: tpu7x:2x2x1
jax: 0.10.0
libtpu: 0.0.40
codegen_flags: <defaults>
</compile_context>

<pallas_src>
import functools

import jax
import jax.numpy as jnp
from jax.experimental import pallas as pl
from jax.experimental.pallas import tpu as pltpu


def _round_up(x, n):
    return ((x + n - 1) // n) * n


def _cdiv(a, b):
    return (a + b - 1) // b


def _vmem_capacity_bytes():
    """Physical VMEM of this TPU generation (fallback: 64 MiB = v7x per-TC)."""
    try:
        info = pltpu.get_tpu_info()
        cap = getattr(info, "vmem_capacity_bytes", None)
        if cap:
            return int(cap)
    except Exception:
        pass
    return 64 * 1024 * 1024


def _kqm_kernel_vpu(x_ref, w_ref, b_ref, o_ref, *, C, C_out):
    """Tiny-channel path: C unrolled VPU FMAs over lane-dense vregs (no MXU).

    x_ref: (C, TS)   w_ref: (C_out, C)   b_ref: (C_out, 1)   o_ref: (C_out, TS)
    Per-slice loads/casts keep the f32 live range to one (1, TS) row at a time.
    """
    w = w_ref[...].astype(jnp.float32)
    acc = w[:, 0:1] * x_ref[0:1, :].astype(jnp.float32)        # (C_out, TS)
    for c in range(1, C):                                      # unrolled at trace time
        acc = acc + w[:, c:c + 1] * x_ref[c:c + 1, :].astype(jnp.float32)
    o_ref[...] = (acc + b_ref[...].astype(jnp.float32)).astype(o_ref.dtype)


def _kqm_kernel_mxu(x_ref, w_ref, b_ref, o_ref):
    """General path: (C_out, C) @ (C, TS) on the MXU, f32 accumulation."""
    acc = jnp.dot(w_ref[...], x_ref[...], preferred_element_type=jnp.float32)
    o_ref[...] = (acc + b_ref[...].astype(jnp.float32)).astype(o_ref.dtype)


def key_query_map(x_nchw, weight, bias):
    """1x1 conv forward (KeyQueryMap).

    x_nchw : (B, C, H, W)
    weight : (C_out, C, 1, 1)   (PyTorch Conv2d layout)
    bias   : (C_out,)
    returns: (B, C_out, H, W)
    """
    B, C, H, W = x_nchw.shape
    C_out = weight.shape[0]
    S = H * W

    # Free reshapes only — no NCHW <-> NHWC transpose passes, no padding copies.
    x3 = x_nchw.reshape(B, C, S)          # (B, C, S)
    w2d = weight.reshape(C_out, C)        # (C_out, C)
    b2d = bias.reshape(C_out, 1)          # (C_out, 1), broadcasts along lanes

    itemsize = jnp.dtype(x_nchw.dtype).itemsize
    w_itemsize = jnp.dtype(weight.dtype).itemsize
    sub = max(8, 32 // itemsize)          # sublane tile height: 8 f32 / 16 bf16 / 32 i8
    w_sub = max(8, 32 // w_itemsize)

    # --- generation-aware VMEM budget ---------------------------------------
    vmem_cap = _vmem_capacity_bytes()     # 128 MiB v5e/v6e, 64 MiB v7x (per TC)
    vmem_limit = (vmem_cap * 3) // 4      # raise scoped limit (default 16/32 MiB)
    tile_budget = (vmem_cap * 3) // 8     # double-buffered in+out tiles live here

    # Resident weight/bias tiles (counted double-buffered, conservatively).
    fixed_bytes = 2 * (
        _round_up(C_out, w_sub) * _round_up(C, 128) * w_itemsize
        + _round_up(C_out, w_sub) * 128 * jnp.dtype(bias.dtype).itemsize
    )
    # Per spatial column: double-buffered input (C rows) + output (C_out rows),
    # each rounded up to the sublane tile height in VMEM.
    bytes_per_col = 2 * (_round_up(C, sub) + _round_up(C_out, sub)) * itemsize
    max_cols = max(128, ((tile_budget - fixed_bytes) // bytes_per_col) // 128 * 128)

    # --- spatial tile: as big as the budget allows ---------------------------
    # Keep >= ~4 total grid steps so the DMA pipeline (and both v7x TensorCores)
    # stay fed; otherwise take the whole (C, S) plane in one contiguous DMA.
    S_128 = _round_up(S, 128)
    min_spatial_steps = _cdiv(4, B)
    ts = min(max_cols, max(128, _round_up(_cdiv(S_128, min_spatial_steps), 128)))
    if ts >= S:
        ts = S                           # whole plane: block == full array dims
        grid_s = 1
    else:
        grid_s = _cdiv(S, ts)            # ragged tail handled by boundary masking

    grid = (B, grid_s)
    kernel = (_kqm_kernel_mxu if C >= 32
              else functools.partial(_kqm_kernel_vpu, C=C, C_out=C_out))

    cost = pl.CostEstimate(
        flops=2 * B * C_out * C * S,
        transcendentals=0,
        bytes_accessed=B * (C + C_out) * S * itemsize + C_out * (C + 1) * w_itemsize,
    )

    out3 = pl.pallas_call(
        kernel,
        out_shape=jax.ShapeDtypeStruct((B, C_out, S), x_nchw.dtype),
        grid_spec=pltpu.PrefetchScalarGridSpec(
            num_scalar_prefetch=0,
            grid=grid,
            in_specs=[
                # x tile: batch dim squeezed, C full, spatial tile on lanes.
                pl.BlockSpec((None, C, ts), lambda b, j: (b, 0, j)),
                # full weight, resident across the grid
                pl.BlockSpec((C_out, C), lambda b, j: (0, 0)),
                # full bias (C_out, 1)
                pl.BlockSpec((C_out, 1), lambda b, j: (0, 0)),
            ],
            out_specs=pl.BlockSpec((None, C_out, ts), lambda b, j: (b, 0, j)),
        ),
        compiler_params=pltpu.CompilerParams(
            dimension_semantics=("parallel", "parallel"),
            vmem_limit_bytes=int(vmem_limit),
        ),
        cost_estimate=cost,
    )(x3, w2d, b2d)

    # Free reshape back to NCHW (no slicing: out_shape is exactly (B, C_out, S)).
    return out3.reshape(B, C_out, H, W)


def _reference(x, weight, bias):
    C_out = weight.shape[0]
    return (jnp.einsum("bchw,oc->bohw", x, weight.reshape(C_out, -1))
            + bias.reshape(1, C_out, 1, 1))


if __name__ == "__main__":
    key = jax.random.PRNGKey(0)

    # --- Module config: channels=4, m=2 -> C_out=2 (VPU tiny-channel path) ---
    B, C, H, W = 2, 4, 16, 16
    m = 2
    C_out = C // m

    kx, kw, kb, key = *jax.random.split(key, 3), key
    bound = 1.0 / (C ** 0.5)
    x = jax.random.normal(kx, (B, C, H, W), dtype=jnp.float32)
    weight = jax.random.uniform(kw, (C_out, C, 1, 1), minval=-bound,
                                maxval=bound, dtype=jnp.float32)
    bias = jax.random.uniform(kb, (C_out,), minval=-bound, maxval=bound,
                              dtype=jnp.float32)

    y = jax.block_until_ready(key_query_map(x, weight, bias))
    y_ref = _reference(x, weight, bias)
    assert y.shape == (B, C_out, H, W)
    assert jnp.allclose(y, y_ref, atol=1e-5, rtol=1e-5), \
        float(jnp.max(jnp.abs(y - y_ref)))

    # --- Larger-channel, non-128-aligned spatial (MXU + whole-plane path) ----
    B2, C2, H2, W2 = 2, 64, 10, 10          # S = 100, whole plane per step
    C2_out = C2 // m
    kx2, kw2, kb2, key = *jax.random.split(key, 3), key
    bound2 = 1.0 / (C2 ** 0.5)
    x2 = jax.random.normal(kx2, (B2, C2, H2, W2), dtype=jnp.float32)
    weight2 = jax.random.uniform(kw2, (C2_out, C2, 1, 1), minval=-bound2,
                                 maxval=bound2, dtype=jnp.float32)
    bias2 = jax.random.uniform(kb2, (C2_out,), minval=-bound2, maxval=bound2,
                               dtype=jnp.float32)

    y2 = jax.block_until_ready(key_query_map(x2, weight2, bias2))
    y2_ref = _reference(x2, weight2, bias2)
    assert y2.shape == (B2, C2_out, H2, W2)
    assert jnp.allclose(y2, y2_ref, atol=1e-4, rtol=1e-4), \
        float(jnp.max(jnp.abs(y2 - y2_ref)))

    # --- Ragged spatial tail (S % ts != 0): boundary-masked blocks, no pad ----
    B3, C3, H3, W3 = 1, 4, 20, 20           # S = 400 -> ts = 128, grid_s = 4
    C3_out = C3 // m
    kx3, kw3, kb3, _ = jax.random.split(key, 4)
    bound3 = 1.0 / (C3 ** 0.5)
    x3 = jax.random.normal(kx3, (B3, C3, H3, W3), dtype=jnp.float32)
    weight3 = jax.random.uniform(kw3, (C3_out, C3, 1, 1), minval=-bound3,
                                 maxval=bound3, dtype=jnp.float32)
    bias3 = jax.random.uniform(kb3, (C3_out,), minval=-bound3, maxval=bound3,
                               dtype=jnp.float32)

    y3 = jax.block_until_ready(key_query_map(x3, weight3, bias3))
    y3_ref = _reference(x3, weight3, bias3)
    assert y3.shape == (B3, C3_out, H3, W3)
    assert jnp.allclose(y3, y3_ref, atol=1e-5, rtol=1e-5), \
        float(jnp.max(jnp.abs(y3 - y3_ref)))

    print("KERNEL_OK")
</pallas_src>

<mosaic_0001>
module attributes {stable_mosaic.version = 11 : i64} {
  func.func @_kqm_kernel_vpu(%arg0: i32, %arg1: i32, %arg2: memref<1x4x128xf32, #tpu.memory_space<vmem>>, %arg3: memref<2x4xf32, #tpu.memory_space<vmem>>, %arg4: memref<2x1xf32, #tpu.memory_space<vmem>>, %arg5: memref<1x2x128xf32, #tpu.memory_space<vmem>>) attributes {dimension_semantics = [#tpu.dimension_semantics<parallel>, #tpu.dimension_semantics<parallel>], iteration_bounds = array<i64: 2, 2>, scalar_prefetch = 0 : i64, scratch_operands = 0 : i64, tpu.core_type = #tpu.core_type<tc>, window_params = [{transform_indices = @transform_0, window_bounds = array<i64: 1, 4, 128>}, {pipeline_mode = #tpu.pipeline_mode<synchronous>, transform_indices = @transform_1, window_bounds = array<i64: 2, 4>}, {pipeline_mode = #tpu.pipeline_mode<synchronous>, transform_indices = @transform_2, window_bounds = array<i64: 2, 1>}, {transform_indices = @transform_3, window_bounds = array<i64: 1, 2, 128>}]} {
    %c0 = arith.constant 0 : index
    %c0_0 = arith.constant 0 : index
    %0 = vector.load %arg3[%c0, %c0_0] : memref<2x4xf32, #tpu.memory_space<vmem>>, vector<2x4xf32>
    %1 = vector.extract_strided_slice %0 {offsets = [0, 0], sizes = [2, 1], strides = [1, 1]} : vector<2x4xf32> to vector<2x1xf32>
    %c0_1 = arith.constant 0 : index
    %c0_2 = arith.constant 0 : index
    %c0_3 = arith.constant 0 : index
    %2 = vector.load %arg2[%c0_1, %c0_2, %c0_3] : memref<1x4x128xf32, #tpu.memory_space<vmem>>, vector<1x1x128xf32>
    %3 = vector.shape_cast %2 : vector<1x1x128xf32> to vector<1x128xf32>
    %4 = vector.broadcast %1 : vector<2x1xf32> to vector<2x128xf32>
    %5 = vector.broadcast %3 : vector<1x128xf32> to vector<2x128xf32>
    %6 = arith.mulf %4, %5 : vector<2x128xf32>
    %7 = vector.extract_strided_slice %0 {offsets = [0, 1], sizes = [2, 1], strides = [1, 1]} : vector<2x4xf32> to vector<2x1xf32>
    %c0_4 = arith.constant 0 : index
    %c1 = arith.constant 1 : index
    %c0_5 = arith.constant 0 : index
    %8 = vector.load %arg2[%c0_4, %c1, %c0_5] : memref<1x4x128xf32, #tpu.memory_space<vmem>>, vector<1x1x128xf32>
    %9 = vector.shape_cast %8 : vector<1x1x128xf32> to vector<1x128xf32>
    %10 = vector.broadcast %7 : vector<2x1xf32> to vector<2x128xf32>
    %11 = vector.broadcast %9 : vector<1x128xf32> to vector<2x128xf32>
    %12 = arith.mulf %10, %11 : vector<2x128xf32>
    %13 = arith.addf %6, %12 : vector<2x128xf32>
    %14 = vector.extract_strided_slice %0 {offsets = [0, 2], sizes = [2, 1], strides = [1, 1]} : vector<2x4xf32> to vector<2x1xf32>
    %c0_6 = arith.constant 0 : index
    %c2 = arith.constant 2 : index
    %c0_7 = arith.constant 0 : index
    %15 = vector.load %arg2[%c0_6, %c2, %c0_7] : memref<1x4x128xf32, #tpu.memory_space<vmem>>, vector<1x1x128xf32>
    %16 = vector.shape_cast %15 : vector<1x1x128xf32> to vector<1x128xf32>
    %17 = vector.broadcast %14 : vector<2x1xf32> to vector<2x128xf32>
    %18 = vector.broadcast %16 : vector<1x128xf32> to vector<2x128xf32>
    %19 = arith.mulf %17, %18 : vector<2x128xf32>
    %20 = arith.addf %13, %19 : vector<2x128xf32>
    %21 = vector.extract_strided_slice %0 {offsets = [0, 3], sizes = [2, 1], strides = [1, 1]} : vector<2x4xf32> to vector<2x1xf32>
    %c0_8 = arith.constant 0 : index
    %c3 = arith.constant 3 : index
    %c0_9 = arith.constant 0 : index
    %22 = vector.load %arg2[%c0_8, %c3, %c0_9] : memref<1x4x128xf32, #tpu.memory_space<vmem>>, vector<1x1x128xf32>
    %23 = vector.shape_cast %22 : vector<1x1x128xf32> to vector<1x128xf32>
    %24 = vector.broadcast %21 : vector<2x1xf32> to vector<2x128xf32>
    %25 = vector.broadcast %23 : vector<1x128xf32> to vector<2x128xf32>
    %26 = arith.mulf %24, %25 : vector<2x128xf32>
    %27 = arith.addf %20, %26 : vector<2x128xf32>
    %c0_10 = arith.constant 0 : index
    %c0_11 = arith.constant 0 : index
    %28 = vector.load %arg4[%c0_10, %c0_11] : memref<2x1xf32, #tpu.memory_space<vmem>>, vector<2x1xf32>
    %29 = vector.broadcast %28 : vector<2x1xf32> to vector<2x128xf32>
    %30 = arith.addf %27, %29 : vector<2x128xf32>
    %c0_12 = arith.constant 0 : index
    %c0_13 = arith.constant 0 : index
    %c0_14 = arith.constant 0 : index
    %31 = vector.load %arg5[%c0_12, %c0_13, %c0_14] : memref<1x2x128xf32, #tpu.memory_space<vmem>>, vector<1x2x128xf32>
    %32 = vector.shape_cast %31 : vector<1x2x128xf32> to vector<2x128xf32>
    %33 = vector.shape_cast %30 : vector<2x128xf32> to vector<1x2x128xf32>
    tpu.vector_store %arg5[%c0_12, %c0_13, %c0_14], %33 {strides = array<i32>} : memref<1x2x128xf32, #tpu.memory_space<vmem>>, vector<1x2x128xf32>,
    return
  }
  func.func @transform_0(%arg0: i32, %arg1: i32) -> (i32, i32, i32) {
    %c0_i32 = arith.constant 0 : i32
    %c0_i32_0 = arith.constant 0 : i32
    return %arg0, %c0_i32, %arg1 : i32, i32, i32
  }
  func.func @transform_1(%arg0: i32, %arg1: i32) -> (i32, i32) {
    %c0_i32 = arith.constant 0 : i32
    %c0_i32_0 = arith.constant 0 : i32
    %c0_i32_1 = arith.constant 0 : i32
    return %c0_i32, %c0_i32_0 : i32, i32
  }
  func.func @transform_2(%arg0: i32, %arg1: i32) -> (i32, i32) {
    %c0_i32 = arith.constant 0 : i32
    %c0_i32_0 = arith.constant 0 : i32
    %c0_i32_1 = arith.constant 0 : i32
    return %c0_i32, %c0_i32_0 : i32, i32
  }
  func.func @transform_3(%arg0: i32, %arg1: i32) -> (i32, i32, i32) {
    %c0_i32 = arith.constant 0 : i32
    %c0_i32_0 = arith.constant 0 : i32
    return %arg0, %c0_i32, %arg1 : i32, i32, i32
  }
}

</mosaic_0001>

<llo_original>
// kernel: tpu_custom_call.1
$region0: #{tpu_custom_call.1}
  #allocation0 [shape = 'u32[]', space=smem, size = 0x4, offset = 0x4, fixed_abs, tag = 'smem constant byte address 0x4 - core index']
  #allocation1 [shape = 'u32[144,128]{1,0:T(1,128)}', space=vmem, size = 0x12000, scoped, tag = 'internal scratch']
  %s0 = inlined_call_operand.hbm [shape: f32[2,4,256], index: 0, kind: input, shape index: {}]
  %s1 = inlined_call_operand.vmem [shape: f32[2,4], index: 1, kind: input, shape index: {}]
  %s2 = inlined_call_operand.vmem [shape: f32[2,1], index: 2, kind: input, shape index: {}]
  %s3 = inlined_call_operand.hbm [shape: f32[2,2,256], index: 3, kind: output, shape index: {}]
  %s4 = sld [smem:[#allocation0]]
  $region49: #{tpu_custom_call.1} parent=0
    _
  %s6 = ssub.s32 1, %s4
  %s7 = scalar_select 0, %s6, %s4
  $region1: #{tpu_custom_call.1} parent=0
    #allocation2 [shape = 'u8[4096]{0}', space=vmem, size = 0x1000, scoped, tag = 'input window, operand 0']
    #allocation3 [shape = 's32[2]{0}', space=sflag, size = 0x8, scoped, tag = 'scoped memory for tpu_custom_call.1']
    #allocation4 [shape = 's32[2]{0}', space=sflag, size = 0x8, scoped, tag = 'scoped memory for tpu_custom_call.1']
    #allocation5 [shape = 'u8[2048]{0}', space=vmem, size = 0x800, scoped, tag = 'output window, operand 0']
    %8 = vsyncpa [#allocation3], 0
    %s9 = scalar_lea.sflag [#allocation3], 1
    %10 = vsyncpa %s9, 0
    %11 = vsyncpa [#allocation4], 0
    %s12 = scalar_lea.sflag [#allocation4], 1
    %13 = vsyncpa %s12, 0
    loop: start=0, step=1, limit=6
    $region2: #{tpu_custom_call.1} parent=1 // loop_pre_header
      _
    $region3: #{tpu_custom_call.1} parent=1 // loop_header
      %s15 = sphi 0, %s19
      %p16 = scmp.ge.s32.totalorder %s15, 6
      %s22 = sphi 0, %s34
      %s23 = sphi 0, %s30
      %s24 = sphi 0, %s22
      %s25 = sphi 0, %s23
      %s26 = sphi 0, %s24
      %s27 = sphi 0, %s25
      %s39 = sphi 0, %s41
      %s42 = sphi 0, %s39
      %s43 = sphi 0, %s42
      %s59 = sphi 0, %s43
      %s63 = sphi 0, %s63
      %s65 = sphi 0, %s63
      %s66 = sphi 0, %s65
      %s80 = sphi 0, %s66
      %s84 = sphi 0, %s84
      %s86 = sphi 0, %s84
      %s87 = sphi 0, %s86
      %s101 = sphi 0, %s87
      %s109 = sphi 0, %s111
      %s112 = sphi 0, %s109
      %s113 = sphi 0, %s112
      %s129 = sphi 0, %s113
    $region4: #{tpu_custom_call.1} parent=1 // loop_header_branch
      %18 = sbr.rel (%p16) target = $region8
    $region5: #{tpu_custom_call.1} parent=1 // loop_body
      %s20 = ssub.s32 %s15, 1
      %s21 = ssub.s32 %s15, 2
      %s28 = sadd.s32 1, %s23
      %p29 = scmp.ge.s32.totalorder %s28, 2
      %s30 = scalar_select %p29, 0, %s28
      %s31 = sadd.s32 1, %s22
      %s32 = scalar_select %p29, %s31, %s22
      %p33 = scmp.ge.s32.totalorder %s32, 2
      %s34 = scalar_select %p33, 0, %s32
      %s35 = ssub.s32 %s22, %s34
      %s36 = ssub.s32 %s23, %s30
      %s37 = sor.u32 %s35, %s36
      %p38 = scmp.eq.s32.totalorder %s37, 0
      %s40 = sadd.s32 %s39, 1
      %s41 = scalar_select %p38, %s39, %s40
      %p44 = pneg %p38
      %p45 = scmp.eq.s32.totalorder %s15, 3
      %p46 = por %p44, %p45
      %p47 = scmp.ne.s32.totalorder %s39, %s42
      %p48 = scmp.eq.s32.totalorder %s15, 0
      %p49 = por %p47, %p48
      %p50 = scmp.ne.s32.totalorder %s39, %s42
      %p51 = scmp.eq.s32.totalorder %s20, 3
      %p52 = por %p50, %p51
      %p53 = scmp.ne.s32.totalorder %s42, %s43
      %p54 = scmp.eq.s32.totalorder %s20, 0
      %p55 = por %p53, %p54
      %p56 = scmp.ne.s32.totalorder %s42, %s43
      %p57 = scmp.eq.s32.totalorder %s21, 3
      %p58 = por %p56, %p57
      %p60 = scmp.ne.s32.totalorder %s43, %s59
      %p61 = scmp.eq.s32.totalorder %s21, 0
      %p62 = por %p60, %p61
      %s64 = sadd.s32 %s63, 1
      %p67 = scmp.eq.s32.totalorder %s15, 3
      %p68 = scmp.ne.s32.totalorder %s63, %s65
      %p69 = scmp.eq.s32.totalorder %s15, 0
      %p70 = por %p68, %p69
      %p71 = scmp.ne.s32.totalorder %s63, %s65
      %p72 = scmp.eq.s32.totalorder %s20, 3
      %p73 = por %p71, %p72
      %p74 = scmp.ne.s32.totalorder %s65, %s66
      %p75 = scmp.eq.s32.totalorder %s20, 0
      %p76 = por %p74, %p75
      %p77 = scmp.ne.s32.totalorder %s65, %s66
      %p78 = scmp.eq.s32.totalorder %s21, 3
      %p79 = por %p77, %p78
      %p81 = scmp.ne.s32.totalorder %s66, %s80
      %p82 = scmp.eq.s32.totalorder %s21, 0
      %p83 = por %p81, %p82
      %s85 = sadd.s32 %s84, 1
      %p88 = scmp.eq.s32.totalorder %s15, 3
      %p89 = scmp.ne.s32.totalorder %s84, %s86
      %p90 = scmp.eq.s32.totalorder %s15, 0
      %p91 = por %p89, %p90
      %p92 = scmp.ne.s32.totalorder %s84, %s86
      %p93 = scmp.eq.s32.totalorder %s20, 3
      %p94 = por %p92, %p93
      %p95 = scmp.ne.s32.totalorder %s86, %s87
      %p96 = scmp.eq.s32.totalorder %s20, 0
      %p97 = por %p95, %p96
      %p98 = scmp.ne.s32.totalorder %s86, %s87
      %p99 = scmp.eq.s32.totalorder %s21, 3
      %p100 = por %p98, %p99
      %p102 = scmp.ne.s32.totalorder %s87, %s101
      %p103 = scmp.eq.s32.totalorder %s21, 0
      %p104 = por %p102, %p103
      %s105 = ssub.s32 %s22, %s34
      %s106 = ssub.s32 %s23, %s30
      %s107 = sor.u32 %s105, %s106
      %p108 = scmp.eq.s32.totalorder %s107, 0
      %s110 = sadd.s32 %s109, 1
      %s111 = scalar_select %p108, %s109, %s110
      %p114 = pneg %p108
      %p115 = scmp.eq.s32.totalorder %s15, 3
      %p116 = por %p114, %p115
      %p117 = scmp.ne.s32.totalorder %s109, %s112
      %p118 = scmp.eq.s32.totalorder %s15, 0
      %p119 = por %p117, %p118
      %p120 = scmp.ne.s32.totalorder %s109, %s112
      %p121 = scmp.eq.s32.totalorder %s20, 3
      %p122 = por %p120, %p121
      %p123 = scmp.ne.s32.totalorder %s112, %s113
      %p124 = scmp.eq.s32.totalorder %s20, 0
      %p125 = por %p123, %p124
      %p126 = scmp.ne.s32.totalorder %s112, %s113
      %p127 = scmp.eq.s32.totalorder %s21, 3
      %p128 = por %p126, %p127
      %p130 = scmp.ne.s32.totalorder %s113, %s129
      %p131 = scmp.eq.s32.totalorder %s21, 0
      %p132 = por %p130, %p131
      %p133 = scmp.le.s32.totalorder 1, %s15
      %p134 = scmp.lt.s32.totalorder %s15, 5
      %p135 = pnand %p133, %p134
      %p136 = pneg %p135
      // Predicated region
      $region9: #{tpu_custom_call.1} parent=5 // pred_check
        _
      $region10: #{tpu_custom_call.1} parent=5 // pred_check_branch
        %138 = sbr.rel (%p135) target = $region12
      $region11: #{tpu_custom_call.1} parent=5 // pred_region
        %s139 = ssub.s32 %s15, 1
        // Predicated region
        $region13: #{tpu_custom_call.1} parent=11 // pred_check
          %p140 = pneg %p76
        $region14: #{tpu_custom_call.1} parent=11 // pred_check_branch
          %142 = sbr.rel (%p140) target = $region16
        $region15: #{tpu_custom_call.1} parent=11 // pred_region
          _
        $region16: #{tpu_custom_call.1} parent=11 // pred_fallthru
          _
        // Predicated region
        $region17: #{tpu_custom_call.1} parent=11 // pred_check
          %p143 = pneg %p97
        $region18: #{tpu_custom_call.1} parent=11 // pred_check_branch
          %145 = sbr.rel (%p143) target = $region20
        $region19: #{tpu_custom_call.1} parent=11 // pred_region
          _
        $region20: #{tpu_custom_call.1} parent=11 // pred_fallthru
          _
      $region12: #{tpu_custom_call.1} parent=5 // pred_fallthru
        _
      %p146 = scmp.lt.s32.totalorder %s15, 4
      // Predicated region
      $region21: #{tpu_custom_call.1} parent=5 // pred_check
        %p147 = pneg %p146
      $region22: #{tpu_custom_call.1} parent=5 // pred_check_branch
        %149 = sbr.rel (%p147) target = $region24
      $region23: #{tpu_custom_call.1} parent=5 // pred_region
        // Predicated region
        $region25: #{tpu_custom_call.1} parent=23 // pred_check
          %p150 = pneg %p49
        $region26: #{tpu_custom_call.1} parent=23 // pred_check_branch
          %152 = sbr.rel (%p150) target = $region28
        $region27: #{tpu_custom_call.1} parent=23 // pred_region
          %s153 = sand.u32 %s39, 1
          %s154 = scalar_lea.sflag [#allocation3], %s153
          %s155 = sand.u32 %s39, 1
          %s156 = smul.addr %s155, 4
          %s157 = scalar_lea.vmem [#allocation2], %s156
          %s159 = ssub.s32 64, 64
          %160 = vsyncadd %s154, %s159
          %s161 = smul.addr %s22, 2
          %s162 = sadd.s32 %s23, %s161
          %s163 = smul.addr %s162, 64
          %s164 = scalar_lea.hbm %s0, %s163
          %s166 = sshll.u32 %s157, 4
          %s167 = int_to_ptr.vmem [resolvable:$true] %s166
          %169 = dma.hbm_to_vmem [thread:$0]  %s164, 64, %s167, %s154
        $region28: #{tpu_custom_call.1} parent=23 // pred_fallthru
          _
      $region24: #{tpu_custom_call.1} parent=5 // pred_fallthru
        _
      %p170 = scmp.le.s32.totalorder 1, %s15
      %p171 = scmp.lt.s32.totalorder %s15, 5
      %p172 = pnand %p170, %p171
      %p173 = pneg %p172
      // Predicated region
      $region29: #{tpu_custom_call.1} parent=5 // pred_check
        _
      $region30: #{tpu_custom_call.1} parent=5 // pred_check_branch
        %175 = sbr.rel (%p172) target = $region32
      $region31: #{tpu_custom_call.1} parent=5 // pred_region
        %s176 = ssub.s32 %s15, 1
        %s177 = sand.u32 %s42, 1
        %s178 = scalar_lea.sflag [#allocation3], %s177
        %s179 = sand.u32 %s42, 1
        %s180 = smul.addr %s179, 4
        %s181 = scalar_lea.vmem [#allocation2], %s180
        // Predicated region
        $region33: #{tpu_custom_call.1} parent=31 // pred_check
          %p182 = pneg %p55
        $region34: #{tpu_custom_call.1} parent=31 // pred_check_branch
          %184 = sbr.rel (%p182) target = $region36
        $region35: #{tpu_custom_call.1} parent=31 // pred_region
          %185 = dma.done %s178, 64
        $region36: #{tpu_custom_call.1} parent=31 // pred_fallthru
          _
        %s186 = sand.u32 %s42, 1
        %s187 = scalar_lea.sflag [#allocation3], %s186
        %s188 = sand.u32 %s42, 1
        %s189 = smul.addr %s188, 4
        %s190 = scalar_lea.vmem [#allocation2], %s189
        %p191 = pneg %p55
        %p192 = pneg %p52
        %p193 = pneg %p76
        %p194 = pneg %p73
        %p195 = pneg %p97
        %p196 = pneg %p94
        %p197 = pneg %p125
        %p198 = pneg %p122
        %s199 = sand.u32 %s112, 1
        %s200 = scalar_lea.sflag [#allocation4], %s199
        %s201 = sand.u32 %s112, 1
        %s202 = smul.addr %s201, 2
        %s203 = scalar_lea.vmem [#allocation5], %s202
        %v204 = vld [vmem:[%s1] sm:$0x3]
        %v205 = vld [vmem:[%s181] sm:$0x1]
        %207 = vset.pattern.permute.xlu0 0
        %208 = vperm.xlu0 %207, %v204
        %v209 = vpop.permute.xlu0 %208
        %v211 = vlaneseq
        %v212 = vshrl.u32 %v211, 7
        %v213 = vsub.s32 0, %v212
        %v214 = vrot.slane %v205, %v213
        %v215 = vmul.f32 %v209, %v214
        %v216 = vld [vmem:[%s181 + $0x1] sm:$0x1]
        %217 = vset.pattern.permute.xlu0 1
        %218 = vperm.xlu0 %217, %v204
        %v219 = vpop.permute.xlu0 %218
        %v221 = vlaneseq
        %v222 = vshrl.u32 %v221, 7
        %v223 = vsub.s32 0, %v222
        %v224 = vrot.slane %v216, %v223
        %v225 = vmul.f32 %v219, %v224
        %v226 = vadd.f32 %v215, %v225
        %v227 = vld [vmem:[%s181 + $0x2] sm:$0x1]
        %228 = vset.pattern.permute.xlu0 2
        %229 = vperm.xlu0 %228, %v204
        %v230 = vpop.permute.xlu0 %229
        %v232 = vlaneseq
        %v233 = vshrl.u32 %v232, 7
        %v234 = vsub.s32 0, %v233
        %v235 = vrot.slane %v227, %v234
        %v236 = vmul.f32 %v230, %v235
        %v237 = vadd.f32 %v226, %v236
        %v238 = vld [vmem:[%s181 + $0x3] sm:$0x1]
        %239 = vset.pattern.permute.xlu0 3
        %240 = vperm.xlu0 %239, %v204
        %v241 = vpop.permute.xlu0 %240
        %v243 = vlaneseq
        %v244 = vshrl.u32 %v243, 7
        %v245 = vsub.s32 0, %v244
        %v246 = vrot.slane %v238, %v245
        %v247 = vmul.f32 %v241, %v246
        %v248 = vadd.f32 %v237, %v247
        %v249 = vld [vmem:[%s2] sm:$0x3]
        %251 = vset.pattern.permute.xlu0 0
        %252 = vperm.xlu0 %251, %v249
        %v253 = vpop.permute.xlu0 %252
        %v255 = vadd.f32 %v248, %v253
        %256 = vst [vmem:[%s203] sm:$0x3] %v255
        %s257 = sand.u32 %s112, 1
        %s258 = scalar_lea.sflag [#allocation4], %s257
        %s259 = sand.u32 %s112, 1
        %s260 = smul.addr %s259, 2
        %s261 = scalar_lea.vmem [#allocation5], %s260
        // Predicated region
        $region37: #{tpu_custom_call.1} parent=31 // pred_check
          %p262 = pneg %p122
        $region38: #{tpu_custom_call.1} parent=31 // pred_check_branch
          %264 = sbr.rel (%p262) target = $region40
        $region39: #{tpu_custom_call.1} parent=31 // pred_region
          %s266 = ssub.s32 32, 32
          %267 = vsyncadd %s258, %s266
          %s268 = smul.addr %s24, 2
          %s269 = sadd.s32 %s25, %s268
          %s270 = smul.addr %s269, 32
          %s271 = scalar_lea.hbm %s3, %s270
          %s273 = sshll.u32 %s261, 4
          %s274 = int_to_ptr.vmem [resolvable:$true] %s273
          %276 = dma.vmem_to_hbm [thread:$0]  %s274, 32, %s271, %s258
        $region40: #{tpu_custom_call.1} parent=31 // pred_fallthru
          _
      $region32: #{tpu_custom_call.1} parent=5 // pred_fallthru
        _
      %p277 = scmp.le.s32.totalorder 2, %s15
      // Predicated region
      $region41: #{tpu_custom_call.1} parent=5 // pred_check
        %p278 = pneg %p277
      $region42: #{tpu_custom_call.1} parent=5 // pred_check_branch
        %280 = sbr.rel (%p278) target = $region44
      $region43: #{tpu_custom_call.1} parent=5 // pred_region
        %s281 = ssub.s32 %s15, 2
        // Predicated region
        $region45: #{tpu_custom_call.1} parent=43 // pred_check
          %p282 = pneg %p128
        $region46: #{tpu_custom_call.1} parent=43 // pred_check_branch
          %284 = sbr.rel (%p282) target = $region48
        $region47: #{tpu_custom_call.1} parent=43 // pred_region
          %s285 = sand.u32 %s113, 1
          %s286 = scalar_lea.sflag [#allocation4], %s285
          %s287 = sand.u32 %s113, 1
          %s288 = smul.addr %s287, 2
          %s289 = scalar_lea.vmem [#allocation5], %s288
          %290 = dma.done %s286, 32
        $region48: #{tpu_custom_call.1} parent=43 // pred_fallthru
          _
      $region44: #{tpu_custom_call.1} parent=5 // pred_fallthru
        _
    $region6: #{tpu_custom_call.1} parent=1 // loop_footer
      %s19 = sadd.s32 1, %s15
    $region7: #{tpu_custom_call.1} parent=1 // loop_footer_branch
      %14 = sbr.rel target = $region3
    $region8: #{tpu_custom_call.1} parent=1 // loop_exit
      _
    %291 = vsyncpa [#allocation3], 1
    %s292 = scalar_lea.sflag [#allocation3], 1
    %293 = vsyncpa %s292, 1
    %294 = vsyncpa [#allocation4], 1
    %s295 = scalar_lea.sflag [#allocation4], 1
    %296 = vsyncpa %s295, 1

</llo_original>
